<compile_context>
chip_gen: v7x
topology: tpu7x:2x2x1
jax: 0.10.0
libtpu: 0.0.40
codegen_flags: <defaults>
</compile_context>

<pallas_src>
import functools

import numpy as np
import jax
import jax.numpy as jnp
from jax import lax
from jax.experimental import pallas as pl
from jax.experimental.pallas import tpu as pltpu

# --- constants (identical to the PyTorch reference, including the fact that
#     ALPHA_2_SQ is defined as ALPHA**2 in the original source) ---
ALPHA = float(4.0 - 2.0 * np.sqrt(2))
ALPHA_2 = float(8.0 - 4.0 * np.sqrt(2))
ALPHA_2_SQ = float(ALPHA ** 2.0)
ALPHA_SQ = float(ALPHA ** 2.0)
BETA = -float(np.log(np.sqrt(2) + 1))
BETA_2 = -float(0.5 * np.log(np.sqrt(2) + 1))
ETA_SQ = float(np.pi / 8.0)


def _round_up(x, m):
    return ((x + m - 1) // m) * m


def _kappa(x, const=1.0, alphasq=1.0):
    # single EUP rsqrt instead of sqrt + divide
    return lax.rsqrt(const + x * alphasq * ETA_SQ)


def _npn_net_kernel(*refs, activations):
    """Whole-network fused forward.

    refs layout:
      refs[0] : (Bp, in_pad)  f32   input mean
      refs[1] : (Bp, in_pad)  f32   input variance
      then per layer li (static python loop, 5 refs each):
        refs[2+5*li] : (in_pad, out_pad) bf16  W_m                 (zero padded)
        refs[3+5*li] : (in_pad, out_pad) bf16  W_s + W_m^2         (zero padded)
        refs[4+5*li] : (in_pad, out_pad) bf16  W_s = softplus(M_s) (zero padded)
        refs[5+5*li] : (1, out_pad)      f32   b_m                 (zero padded)
        refs[6+5*li] : (1, out_pad)      f32   softplus(p_s)       (zero padded)
      refs[-2], refs[-1] : (Bp, out_pad) f32  output mean / variance
    """
    am_ref, as_ref = refs[-2], refs[-1]
    xm = refs[0][...]
    xs = refs[1][...]

    for li, act in enumerate(activations):
        base = 2 + 5 * li
        wm = refs[base + 0][...]   # bf16
        wv = refs[base + 1][...]   # bf16 : softplus(M_s) + W_m^2
        ws = refs[base + 2][...]   # bf16 : softplus(M_s)
        bm = refs[base + 3][...]   # f32  (1, out_pad)
        bs = refs[base + 4][...]   # f32  (1, out_pad)

        xm_b = xm.astype(jnp.bfloat16)
        xs_b = xs.astype(jnp.bfloat16)
        xm2_b = (xm * xm).astype(jnp.bfloat16)

        # mean path: 1 MXU matmul (bf16 x bf16 -> f32 accumulate)
        o_m = bm + jnp.dot(xm_b, wm, preferred_element_type=jnp.float32)
        # variance path: 2 MXU matmuls, no K-concat temp:
        #   o_s = b_s + xs @ (W_s + W_m^2) + (xm^2) @ W_s
        o_s = (bs
               + jnp.dot(xs_b, wv, preferred_element_type=jnp.float32)
               + jnp.dot(xm2_b, ws, preferred_element_type=jnp.float32))

        # NOTE: as in the original module, no clamp on o_s; rsqrt would go NaN
        # if o_s < -1/ETA_SQ (cannot happen with non-negative input variance).
        if act == 'sigmoid':
            a_m = jax.nn.sigmoid(o_m * _kappa(o_s))
            a_s = (jax.nn.sigmoid((o_m + BETA) * ALPHA
                                  * _kappa(o_s, alphasq=ALPHA_SQ))
                   - a_m * a_m)
        elif act == 'tanh':
            a_m = 2.0 * jax.nn.sigmoid(o_m * _kappa(o_s, const=0.25)) - 1.0
            a_s = (4.0 * jax.nn.sigmoid((o_m + BETA_2) * ALPHA_2
                                        * _kappa(o_s, alphasq=ALPHA_2_SQ))
                   - a_m * a_m - 2.0 * a_m - 1.0)
        else:  # identity / no activation
            a_m, a_s = o_m, o_s

        xm, xs = a_m, a_s

    am_ref[...] = xm
    as_ref[...] = xs


@functools.partial(jax.jit, static_argnames=("activations", "num_classes"))
def _npn_forward(x_m, x_s, flat_params, activations, num_classes):
    """Pads inputs to (16,128)-aligned shapes, runs the fused kernel, slices."""
    B, in_feat = x_m.shape
    B_pad = _round_up(max(B, 1), 16)           # 16: bf16 sublane packing
    in_pad = flat_params[0].shape[0]           # first layer W_m rows (padded)
    out_pad = flat_params[-5].shape[1]         # last  layer W_m cols (padded)

    # single fused pad op instead of zeros + dynamic-update-slice
    xm_p = jnp.pad(x_m.astype(jnp.float32),
                   ((0, B_pad - B), (0, in_pad - in_feat)))
    xs_p = jnp.pad(x_s.astype(jnp.float32),
                   ((0, B_pad - B), (0, in_pad - in_feat)))

    # explicit scoped-VMEM budget: all padded weights + activations + headroom
    weight_bytes = sum(int(np.prod(p.shape)) * p.dtype.itemsize
                       for p in flat_params)
    max_pad = max(in_pad, max(p.shape[-1] for p in flat_params))
    act_bytes = 10 * B_pad * max_pad * 4       # f32 acts + bf16 temps, generous
    vmem_limit = int(min(2 * weight_bytes + act_bytes + (16 << 20), 56 << 20))

    kernel = functools.partial(_npn_net_kernel, activations=activations)
    n_in = 2 + len(flat_params)
    vmem_spec = pl.BlockSpec(memory_space=pltpu.MemorySpace.VMEM)

    a_m, a_s = pl.pallas_call(
        kernel,
        out_shape=(jax.ShapeDtypeStruct((B_pad, out_pad), jnp.float32),
                   jax.ShapeDtypeStruct((B_pad, out_pad), jnp.float32)),
        in_specs=[vmem_spec] * n_in,
        out_specs=(vmem_spec, vmem_spec),
        compiler_params=pltpu.CompilerParams(vmem_limit_bytes=vmem_limit),
    )(xm_p, xs_p, *flat_params)

    return a_m[:B, :num_classes], a_s[:B, :num_classes]


class GaussianNPN:
    """JAX/Pallas re-implementation of the PyTorch GaussianNPN forward pass."""

    def __init__(self, input_features, output_classes, hidden_sizes,
                 activation='sigmoid', key=None):
        assert len(hidden_sizes) >= 0
        self.num_classes = output_classes
        key = jax.random.PRNGKey(0) if key is None else key

        sizes = [input_features] + list(hidden_sizes) + [output_classes]
        padded = [_round_up(s, 128) for s in sizes]
        # hidden layers use `activation`, the final layer always uses sigmoid
        self.acts = tuple([activation] * len(hidden_sizes) + ['sigmoid'])

        self.raw_params = []   # (W_m, M_s, b_m, p_s) for reference checking
        flat = []              # padded, precomputed per-layer kernel inputs
        for i in range(len(sizes) - 1):
            _in, _out = sizes[i], sizes[i + 1]
            _inp, _outp = padded[i], padded[i + 1]
            key, k1, k2 = jax.random.split(key, 3)
            scale_m = 2.0 * np.sqrt(6.0) / np.sqrt(_in + _out)
            scale_s = 1.0 * np.sqrt(6.0) / np.sqrt(_in + _out)
            W_m = scale_m * (jax.random.uniform(k1, (_in, _out), jnp.float32) - 0.5)
            # keep W_s strictly positive so log(exp(W_s) - 1) is finite
            W_s_init = scale_s * jax.random.uniform(k2, (_in, _out), jnp.float32,
                                                    minval=0.05, maxval=1.0)
            M_s = jnp.log(jnp.exp(W_s_init) - 1.0)
            b_m = jnp.zeros((_out,), jnp.float32)
            p_s = jnp.full((_out,), float(np.exp(-1.0)), jnp.float32)
            self.raw_params.append((W_m, M_s, b_m, p_s))

            # --- hoisted weight-side transforms (stable softplus, squares) ---
            W_s = jax.nn.softplus(M_s)          # softplus(M_s)
            b_s = jax.nn.softplus(p_s)          # softplus(p_s)
            W_v = W_s + W_m * W_m               # variance weight for the xs term

            W_m_pad = jnp.zeros((_inp, _outp), jnp.bfloat16)
            W_m_pad = W_m_pad.at[:_in, :_out].set(W_m.astype(jnp.bfloat16))
            W_v_pad = jnp.zeros((_inp, _outp), jnp.bfloat16)
            W_v_pad = W_v_pad.at[:_in, :_out].set(W_v.astype(jnp.bfloat16))
            W_s_pad = jnp.zeros((_inp, _outp), jnp.bfloat16)
            W_s_pad = W_s_pad.at[:_in, :_out].set(W_s.astype(jnp.bfloat16))
            b_m_pad = jnp.zeros((1, _outp), jnp.float32).at[0, :_out].set(b_m)
            b_s_pad = jnp.zeros((1, _outp), jnp.float32).at[0, :_out].set(b_s)

            flat.extend([W_m_pad, W_v_pad, W_s_pad, b_m_pad, b_s_pad])
        self.flat_params = tuple(flat)

    def forward(self, a):
        if isinstance(a, tuple):
            x_m, x_s = a
        else:
            x_m = a
            x_s = jnp.zeros_like(a)
        return _npn_forward(x_m, x_s, self.flat_params, self.acts,
                            self.num_classes)

    # TODO(synk): nn.BCELoss-based `loss()` (training objective) is not part of
    # the forward hot path and is not implemented as a kernel.


# ---------------------------------------------------------------------------
# References for validation
# ---------------------------------------------------------------------------
def _kap_ref(x, const=1.0, alphasq=1.0):
    return 1.0 / jnp.sqrt(const + x * alphasq * ETA_SQ)


def _apply_act(act, o_m, o_s):
    if act == 'sigmoid':
        a_m = jax.nn.sigmoid(o_m * _kap_ref(o_s))
        a_s = (jax.nn.sigmoid((o_m + BETA) * ALPHA * _kap_ref(o_s, alphasq=ALPHA_SQ))
               - a_m ** 2)
    elif act == 'tanh':
        a_m = 2.0 * jax.nn.sigmoid(o_m * _kap_ref(o_s, const=0.25)) - 1.0
        a_s = (4.0 * jax.nn.sigmoid((o_m + BETA_2) * ALPHA_2
                                    * _kap_ref(o_s, alphasq=ALPHA_2_SQ))
               - a_m ** 2 - 2.0 * a_m - 1.0)
    else:
        a_m, a_s = o_m, o_s
    return a_m, a_s


def _reference_forward(raw_params, acts, x_m, x_s):
    """Pure-JAX reference of the original un-fused fp32 formulation."""
    hi = lax.Precision.HIGHEST
    for (W_m, M_s, b_m, p_s), act in zip(raw_params, acts):
        W_s = jnp.log1p(jnp.exp(M_s))
        b_s = jnp.log1p(jnp.exp(p_s))
        o_m = b_m + jnp.dot(x_m, W_m, precision=hi)
        o_s = (b_s + jnp.dot(x_s, W_s, precision=hi)
               + jnp.dot(x_s, W_m ** 2, precision=hi)
               + jnp.dot(x_m ** 2, W_s, precision=hi))
        x_m, x_s = _apply_act(act, o_m, o_s)
    return x_m, x_s


def _rounded_reference_forward(flat_params, acts, xm_p, xs_p):
    """Plain-JAX mirror of the kernel math using the same bf16-rounded weights
    (validates the Pallas kernel structure with tight tolerances)."""
    hi = lax.Precision.HIGHEST
    xm, xs = xm_p, xs_p
    for li, act in enumerate(acts):
        wm = flat_params[5 * li + 0].astype(jnp.float32)
        wv = flat_params[5 * li + 1].astype(jnp.float32)
        ws = flat_params[5 * li + 2].astype(jnp.float32)
        bm = flat_params[5 * li + 3]
        bs = flat_params[5 * li + 4]
        o_m = bm + jnp.dot(xm, wm, precision=hi)
        o_s = (bs + jnp.dot(xs, wv, precision=hi)
               + jnp.dot(xm * xm, ws, precision=hi))
        xm, xs = _apply_act(act, o_m, o_s)
    return xm, xs


if __name__ == "__main__":
    key = jax.random.PRNGKey(0)
    k_model, k_xm, k_xs = jax.random.split(key, 3)

    batch, in_feat, hidden, out_classes = 2, 16, [32], 4
    model = GaussianNPN(in_feat, out_classes, hidden,
                        activation='sigmoid', key=k_model)

    x_m = jax.random.normal(k_xm, (batch, in_feat), jnp.float32)
    x_s = 0.1 * jax.random.uniform(k_xs, (batch, in_feat), jnp.float32)

    a_m, a_s = model.forward((x_m, x_s))
    jax.block_until_ready((a_m, a_s))

    assert a_m.shape == (batch, out_classes)
    assert a_s.shape == (batch, out_classes)
    assert bool(jnp.all(jnp.isfinite(a_m))) and bool(jnp.all(jnp.isfinite(a_s)))

    # (1) structural check: kernel vs. identical math with the same bf16 weights
    B_pad = _round_up(batch, 16)
    in_pad = model.flat_params[0].shape[0]
    xm_p = jnp.pad(x_m, ((0, B_pad - batch), (0, in_pad - in_feat)))
    xs_p = jnp.pad(x_s, ((0, B_pad - batch), (0, in_pad - in_feat)))
    s_m, s_s = _rounded_reference_forward(model.flat_params, model.acts, xm_p, xs_p)
    s_m = s_m[:batch, :out_classes]
    s_s = s_s[:batch, :out_classes]
    assert bool(jnp.allclose(a_m, s_m, rtol=1e-3, atol=1e-4)), "mean mismatch (structural)"
    assert bool(jnp.allclose(a_s, s_s, rtol=1e-3, atol=1e-4)), "variance mismatch (structural)"

    # (2) fidelity check: kernel (bf16 weights) vs. the full-fp32 reference
    r_m, r_s = _reference_forward(model.raw_params, model.acts, x_m, x_s)
    assert bool(jnp.allclose(a_m, r_m, rtol=0.0, atol=2e-2)), "mean mismatch (fp32 ref)"
    assert bool(jnp.allclose(a_s, r_s, rtol=0.0, atol=2e-2)), "variance mismatch (fp32 ref)"

    print("KERNEL_OK")
</pallas_src>

<mosaic_0001>
module attributes {stable_mosaic.version = 11 : i64} {
  func.func @_npn_net_kernel(%arg0: memref<16x128xf32, #tpu.memory_space<vmem>>, %arg1: memref<16x128xf32, #tpu.memory_space<vmem>>, %arg2: memref<128x128xbf16, #tpu.memory_space<vmem>>, %arg3: memref<128x128xbf16, #tpu.memory_space<vmem>>, %arg4: memref<128x128xbf16, #tpu.memory_space<vmem>>, %arg5: memref<1x128xf32, #tpu.memory_space<vmem>>, %arg6: memref<1x128xf32, #tpu.memory_space<vmem>>, %arg7: memref<128x128xbf16, #tpu.memory_space<vmem>>, %arg8: memref<128x128xbf16, #tpu.memory_space<vmem>>, %arg9: memref<128x128xbf16, #tpu.memory_space<vmem>>, %arg10: memref<1x128xf32, #tpu.memory_space<vmem>>, %arg11: memref<1x128xf32, #tpu.memory_space<vmem>>, %arg12: memref<16x128xf32, #tpu.memory_space<vmem>>, %arg13: memref<16x128xf32, #tpu.memory_space<vmem>>) attributes {dimension_semantics = [], scalar_prefetch = 0 : i64, scratch_operands = 0 : i64, tpu.core_type = #tpu.core_type<tc>} {
    %c0 = arith.constant 0 : index
    %c0_0 = arith.constant 0 : index
    %0 = vector.load %arg0[%c0, %c0_0] : memref<16x128xf32, #tpu.memory_space<vmem>>, vector<16x128xf32>
    %c0_1 = arith.constant 0 : index
    %c0_2 = arith.constant 0 : index
    %1 = vector.load %arg1[%c0_1, %c0_2] : memref<16x128xf32, #tpu.memory_space<vmem>>, vector<16x128xf32>
    %c0_3 = arith.constant 0 : index
    %c0_4 = arith.constant 0 : index
    %2 = vector.load %arg2[%c0_3, %c0_4] : memref<128x128xbf16, #tpu.memory_space<vmem>>, vector<128x128xbf16>
    %c0_5 = arith.constant 0 : index
    %c0_6 = arith.constant 0 : index
    %3 = vector.load %arg3[%c0_5, %c0_6] : memref<128x128xbf16, #tpu.memory_space<vmem>>, vector<128x128xbf16>
    %c0_7 = arith.constant 0 : index
    %c0_8 = arith.constant 0 : index
    %4 = vector.load %arg4[%c0_7, %c0_8] : memref<128x128xbf16, #tpu.memory_space<vmem>>, vector<128x128xbf16>
    %c0_9 = arith.constant 0 : index
    %c0_10 = arith.constant 0 : index
    %5 = vector.load %arg5[%c0_9, %c0_10] : memref<1x128xf32, #tpu.memory_space<vmem>>, vector<1x128xf32>
    %c0_11 = arith.constant 0 : index
    %c0_12 = arith.constant 0 : index
    %6 = vector.load %arg6[%c0_11, %c0_12] : memref<1x128xf32, #tpu.memory_space<vmem>>, vector<1x128xf32>
    %7 = arith.truncf %0 : vector<16x128xf32> to vector<16x128xbf16>
    %8 = arith.truncf %1 : vector<16x128xf32> to vector<16x128xbf16>
    %9 = arith.mulf %0, %0 : vector<16x128xf32>
    %10 = arith.truncf %9 : vector<16x128xf32> to vector<16x128xbf16>
    %cst = arith.constant dense<0.000000e+00> : vector<16x128xf32>
    %11 = tpu.matmul %7, %2, %cst {dimension_numbers = #tpu.dot_dimension_numbers<[1], [0], [0], [1], [0, 0, 1, 1], [], []>} : vector<16x128xbf16>, vector<128x128xbf16>, vector<16x128xf32> -> vector<16x128xf32>
    %12 = vector.broadcast %5 : vector<1x128xf32> to vector<16x128xf32>
    %13 = arith.addf %12, %11 : vector<16x128xf32>
    %cst_13 = arith.constant dense<0.000000e+00> : vector<16x128xf32>
    %14 = tpu.matmul %8, %3, %cst_13 {dimension_numbers = #tpu.dot_dimension_numbers<[1], [0], [0], [1], [0, 0, 1, 1], [], []>} : vector<16x128xbf16>, vector<128x128xbf16>, vector<16x128xf32> -> vector<16x128xf32>
    %15 = vector.broadcast %6 : vector<1x128xf32> to vector<16x128xf32>
    %16 = arith.addf %15, %14 : vector<16x128xf32>
    %cst_14 = arith.constant dense<0.000000e+00> : vector<16x128xf32>
    %17 = tpu.matmul %10, %4, %cst_14 {dimension_numbers = #tpu.dot_dimension_numbers<[1], [0], [0], [1], [0, 0, 1, 1], [], []>} : vector<16x128xbf16>, vector<128x128xbf16>, vector<16x128xf32> -> vector<16x128xf32>
    %18 = arith.addf %16, %17 : vector<16x128xf32>
    %cst_15 = arith.constant 1.000000e+00 : f32
    %19 = vector.broadcast %cst_15 : f32 to vector<16x128xf32>
    %20 = arith.mulf %18, %19 : vector<16x128xf32>
    %cst_16 = arith.constant 0.392699093 : f32
    %21 = vector.broadcast %cst_16 : f32 to vector<16x128xf32>
    %22 = arith.mulf %20, %21 : vector<16x128xf32>
    %cst_17 = arith.constant 1.000000e+00 : f32
    %23 = vector.broadcast %cst_17 : f32 to vector<16x128xf32>
    %24 = arith.addf %23, %22 : vector<16x128xf32>
    %25 = math.rsqrt %24 : vector<16x128xf32>
    %26 = arith.mulf %13, %25 : vector<16x128xf32>
    %27 = arith.negf %26 : vector<16x128xf32>
    %28 = math.exp %27 : vector<16x128xf32>
    %cst_18 = arith.constant 1.000000e+00 : f32
    %29 = vector.broadcast %cst_18 : f32 to vector<16x128xf32>
    %30 = arith.addf %29, %28 : vector<16x128xf32>
    %31 = arith.divf %29, %30 : vector<16x128xf32>
    %cst_19 = arith.constant -0.881373584 : f32
    %32 = vector.broadcast %cst_19 : f32 to vector<16x128xf32>
    %33 = arith.addf %13, %32 : vector<16x128xf32>
    %cst_20 = arith.constant 1.17157292 : f32
    %34 = vector.broadcast %cst_20 : f32 to vector<16x128xf32>
    %35 = arith.mulf %33, %34 : vector<16x128xf32>
    %cst_21 = arith.constant 1.37258303 : f32
    %36 = vector.broadcast %cst_21 : f32 to vector<16x128xf32>
    %37 = arith.mulf %18, %36 : vector<16x128xf32>
    %cst_22 = arith.constant 0.392699093 : f32
    %38 = vector.broadcast %cst_22 : f32 to vector<16x128xf32>
    %39 = arith.mulf %37, %38 : vector<16x128xf32>
    %cst_23 = arith.constant 1.000000e+00 : f32
    %40 = vector.broadcast %cst_23 : f32 to vector<16x128xf32>
    %41 = arith.addf %40, %39 : vector<16x128xf32>
    %42 = math.rsqrt %41 : vector<16x128xf32>
    %43 = arith.mulf %35, %42 : vector<16x128xf32>
    %44 = arith.negf %43 : vector<16x128xf32>
    %45 = math.exp %44 : vector<16x128xf32>
    %cst_24 = arith.constant 1.000000e+00 : f32
    %46 = vector.broadcast %cst_24 : f32 to vector<16x128xf32>
    %47 = arith.addf %46, %45 : vector<16x128xf32>
    %48 = arith.divf %46, %47 : vector<16x128xf32>
    %49 = arith.mulf %31, %31 : vector<16x128xf32>
    %50 = arith.subf %48, %49 : vector<16x128xf32>
    %c0_25 = arith.constant 0 : index
    %c0_26 = arith.constant 0 : index
    %51 = vector.load %arg7[%c0_25, %c0_26] : memref<128x128xbf16, #tpu.memory_space<vmem>>, vector<128x128xbf16>
    %c0_27 = arith.constant 0 : index
    %c0_28 = arith.constant 0 : index
    %52 = vector.load %arg8[%c0_27, %c0_28] : memref<128x128xbf16, #tpu.memory_space<vmem>>, vector<128x128xbf16>
    %c0_29 = arith.constant 0 : index
    %c0_30 = arith.constant 0 : index
    %53 = vector.load %arg9[%c0_29, %c0_30] : memref<128x128xbf16, #tpu.memory_space<vmem>>, vector<128x128xbf16>
    %c0_31 = arith.constant 0 : index
    %c0_32 = arith.constant 0 : index
    %54 = vector.load %arg10[%c0_31, %c0_32] : memref<1x128xf32, #tpu.memory_space<vmem>>, vector<1x128xf32>
    %c0_33 = arith.constant 0 : index
    %c0_34 = arith.constant 0 : index
    %55 = vector.load %arg11[%c0_33, %c0_34] : memref<1x128xf32, #tpu.memory_space<vmem>>, vector<1x128xf32>
    %56 = arith.truncf %31 : vector<16x128xf32> to vector<16x128xbf16>
    %57 = arith.truncf %50 : vector<16x128xf32> to vector<16x128xbf16>
    %58 = arith.mulf %31, %31 : vector<16x128xf32>
    %59 = arith.truncf %58 : vector<16x128xf32> to vector<16x128xbf16>
    %cst_35 = arith.constant dense<0.000000e+00> : vector<16x128xf32>
    %60 = tpu.matmul %56, %51, %cst_35 {dimension_numbers = #tpu.dot_dimension_numbers<[1], [0], [0], [1], [0, 0, 1, 1], [], []>} : vector<16x128xbf16>, vector<128x128xbf16>, vector<16x128xf32> -> vector<16x128xf32>
    %61 = vector.broadcast %54 : vector<1x128xf32> to vector<16x128xf32>
    %62 = arith.addf %61, %60 : vector<16x128xf32>
    %cst_36 = arith.constant dense<0.000000e+00> : vector<16x128xf32>
    %63 = tpu.matmul %57, %52, %cst_36 {dimension_numbers = #tpu.dot_dimension_numbers<[1], [0], [0], [1], [0, 0, 1, 1], [], []>} : vector<16x128xbf16>, vector<128x128xbf16>, vector<16x128xf32> -> vector<16x128xf32>
    %64 = vector.broadcast %55 : vector<1x128xf32> to vector<16x128xf32>
    %65 = arith.addf %64, %63 : vector<16x128xf32>
    %cst_37 = arith.constant dense<0.000000e+00> : vector<16x128xf32>
    %66 = tpu.matmul %59, %53, %cst_37 {dimension_numbers = #tpu.dot_dimension_numbers<[1], [0], [0], [1], [0, 0, 1, 1], [], []>} : vector<16x128xbf16>, vector<128x128xbf16>, vector<16x128xf32> -> vector<16x128xf32>
    %67 = arith.addf %65, %66 : vector<16x128xf32>
    %cst_38 = arith.constant 1.000000e+00 : f32
    %68 = vector.broadcast %cst_38 : f32 to vector<16x128xf32>
    %69 = arith.mulf %67, %68 : vector<16x128xf32>
    %cst_39 = arith.constant 0.392699093 : f32
    %70 = vector.broadcast %cst_39 : f32 to vector<16x128xf32>
    %71 = arith.mulf %69, %70 : vector<16x128xf32>
    %cst_40 = arith.constant 1.000000e+00 : f32
    %72 = vector.broadcast %cst_40 : f32 to vector<16x128xf32>
    %73 = arith.addf %72, %71 : vector<16x128xf32>
    %74 = math.rsqrt %73 : vector<16x128xf32>
    %75 = arith.mulf %62, %74 : vector<16x128xf32>
    %76 = arith.negf %75 : vector<16x128xf32>
    %77 = math.exp %76 : vector<16x128xf32>
    %cst_41 = arith.constant 1.000000e+00 : f32
    %78 = vector.broadcast %cst_41 : f32 to vector<16x128xf32>
    %79 = arith.addf %78, %77 : vector<16x128xf32>
    %80 = arith.divf %78, %79 : vector<16x128xf32>
    %cst_42 = arith.constant -0.881373584 : f32
    %81 = vector.broadcast %cst_42 : f32 to vector<16x128xf32>
    %82 = arith.addf %62, %81 : vector<16x128xf32>
    %cst_43 = arith.constant 1.17157292 : f32
    %83 = vector.broadcast %cst_43 : f32 to vector<16x128xf32>
    %84 = arith.mulf %82, %83 : vector<16x128xf32>
    %cst_44 = arith.constant 1.37258303 : f32
    %85 = vector.broadcast %cst_44 : f32 to vector<16x128xf32>
    %86 = arith.mulf %67, %85 : vector<16x128xf32>
    %cst_45 = arith.constant 0.392699093 : f32
    %87 = vector.broadcast %cst_45 : f32 to vector<16x128xf32>
    %88 = arith.mulf %86, %87 : vector<16x128xf32>
    %cst_46 = arith.constant 1.000000e+00 : f32
    %89 = vector.broadcast %cst_46 : f32 to vector<16x128xf32>
    %90 = arith.addf %89, %88 : vector<16x128xf32>
    %91 = math.rsqrt %90 : vector<16x128xf32>
    %92 = arith.mulf %84, %91 : vector<16x128xf32>
    %93 = arith.negf %92 : vector<16x128xf32>
    %94 = math.exp %93 : vector<16x128xf32>
    %cst_47 = arith.constant 1.000000e+00 : f32
    %95 = vector.broadcast %cst_47 : f32 to vector<16x128xf32>
    %96 = arith.addf %95, %94 : vector<16x128xf32>
    %97 = arith.divf %95, %96 : vector<16x128xf32>
    %98 = arith.mulf %80, %80 : vector<16x128xf32>
    %99 = arith.subf %97, %98 : vector<16x128xf32>
    %c0_48 = arith.constant 0 : index
    %c0_49 = arith.constant 0 : index
    %100 = vector.load %arg12[%c0_48, %c0_49] : memref<16x128xf32, #tpu.memory_space<vmem>>, vector<16x128xf32>
    tpu.vector_store %arg12[%c0_48, %c0_49], %80 {strides = array<i32>} : memref<16x128xf32, #tpu.memory_space<vmem>>, vector<16x128xf32>,
    %c0_50 = arith.constant 0 : index
    %c0_51 = arith.constant 0 : index
    %101 = vector.load %arg13[%c0_50, %c0_51] : memref<16x128xf32, #tpu.memory_space<vmem>>, vector<16x128xf32>
    tpu.vector_store %arg13[%c0_50, %c0_51], %99 {strides = array<i32>} : memref<16x128xf32, #tpu.memory_space<vmem>>, vector<16x128xf32>,
    return
  }
}

</mosaic_0001>

<llo_original>
// kernel: _npn_forward.1
$region0: #{_npn_forward.1}
  #allocation0 [shape = 'u32[]', space=smem, size = 0x4, offset = 0x4, fixed_abs, tag = 'smem constant byte address 0x4 - core index']
  #allocation1 [shape = 'u32[144,128]{1,0:T(1,128)}', space=vmem, size = 0x12000, scoped, tag = 'internal scratch']
  %s0 = inlined_call_operand.vmem [shape: f32[16,128], index: 0, kind: input, shape index: {}]
  %s1 = inlined_call_operand.vmem [shape: f32[16,128], index: 1, kind: input, shape index: {}]
  %s2 = inlined_call_operand.hbm [shape: bf16[128,128], index: 2, kind: input, shape index: {}]
  %s3 = inlined_call_operand.hbm [shape: bf16[128,128], index: 3, kind: input, shape index: {}]
  %s4 = inlined_call_operand.hbm [shape: bf16[128,128], index: 4, kind: input, shape index: {}]
  %s5 = inlined_call_operand.hbm [shape: f32[1,128], index: 5, kind: input, shape index: {}]
  %s6 = inlined_call_operand.hbm [shape: f32[1,128], index: 6, kind: input, shape index: {}]
  %s7 = inlined_call_operand.vmem [shape: bf16[128,128], index: 7, kind: input, shape index: {}]
  %s8 = inlined_call_operand.hbm [shape: bf16[128,128], index: 8, kind: input, shape index: {}]
  %s9 = inlined_call_operand.hbm [shape: bf16[128,128], index: 9, kind: input, shape index: {}]
  %s10 = inlined_call_operand.vmem [shape: f32[1,128], index: 10, kind: input, shape index: {}]
  %s11 = inlined_call_operand.vmem [shape: f32[1,128], index: 11, kind: input, shape index: {}]
  %s12 = inlined_call_operand.vmem [shape: f32[16,128], index: 12, kind: output, shape index: {0}]
  %s13 = inlined_call_operand.vmem [shape: f32[16,128], index: 13, kind: output, shape index: {1}]
  %14 = xla_tuple %s12, %s13
  %s15 = sld [smem:[#allocation0]]
  $region94: #{_npn_forward.1} parent=0
    _
  %s17 = ssub.s32 1, %s15
  %s18 = scalar_select 0, %s17, %s15
  $region1: #{_npn_forward.1} parent=0
    #allocation2 [shape = 'u8[32768]{0}', space=vmem, size = 0x8000, scoped, tag = 'input window, operand 2, single buffered']
    #allocation3 [shape = 's32[1]{0}', space=sflag, size = 0x4, scoped, tag = 'scoped memory for _npn_forward.1']
    #allocation4 [shape = 'u8[32768]{0}', space=vmem, size = 0x8000, scoped, tag = 'input window, operand 3, single buffered']
    #allocation5 [shape = 's32[1]{0}', space=sflag, size = 0x4, scoped, tag = 'scoped memory for _npn_forward.1']
    #allocation6 [shape = 'u8[32768]{0}', space=vmem, size = 0x8000, scoped, tag = 'input window, operand 4, single buffered']
    #allocation7 [shape = 'u8[512]{0}', space=vmem, size = 0x400, scoped, tag = 'input window, operand 5, single buffered']
    #allocation8 [shape = 's32[1]{0}', space=sflag, size = 0x4, scoped, tag = 'scoped memory for _npn_forward.1']
    #allocation9 [shape = 'u8[512]{0}', space=vmem, size = 0x400, scoped, tag = 'input window, operand 6, single buffered']
    #allocation10 [shape = 'u8[32768]{0}', space=vmem, size = 0x8000, scoped, tag = 'input window, operand 8, single buffered']
    #allocation11 [shape = 's32[1]{0}', space=sflag, size = 0x4, scoped, tag = 'scoped memory for _npn_forward.1']
    #allocation12 [shape = 'u8[32768]{0}', space=vmem, size = 0x8000, scoped, tag = 'input window, operand 9, single buffered']
    %19 = vsyncpa [#allocation3], 0
    %20 = vsyncpa [#allocation5], 0
    %21 = vsyncpa [#allocation8], 0
    %22 = vsyncpa [#allocation11], 0
    // Predicated region
    $region2: #{_npn_forward.1} parent=1 // pred_check
      _
    $region3: #{_npn_forward.1} parent=1 // pred_check_branch
      %24 = sbr.rel (0) target = $region5
    $region4: #{_npn_forward.1} parent=1 // pred_region
      _
    $region5: #{_npn_forward.1} parent=1 // pred_fallthru
      _
    // Predicated region
    $region6: #{_npn_forward.1} parent=1 // pred_check
      _
    $region7: #{_npn_forward.1} parent=1 // pred_check_branch
      %26 = sbr.rel (0) target = $region9
    $region8: #{_npn_forward.1} parent=1 // pred_region
      _
    $region9: #{_npn_forward.1} parent=1 // pred_fallthru
      _
    // Predicated region
    $region10: #{_npn_forward.1} parent=1 // pred_check
      _
    $region11: #{_npn_forward.1} parent=1 // pred_check_branch
      %28 = sbr.rel (0) target = $region13
    $region12: #{_npn_forward.1} parent=1 // pred_region
      %s30 = ssub.s32 1024, 1024
      %31 = vsyncadd [#allocation3], %s30
      %s32 = sshll.u32 [#allocation2], 4
      %s33 = int_to_ptr.vmem [resolvable:$true] %s32
      %38 = dma.hbm_to_vmem [thread:$0]  %s2, 1024, %s33, [#allocation3], 64, 64, 4
    $region13: #{_npn_forward.1} parent=1 // pred_fallthru
      _
    // Predicated region
    $region14: #{_npn_forward.1} parent=1 // pred_check
      _
    $region15: #{_npn_forward.1} parent=1 // pred_check_branch
      %40 = sbr.rel (0) target = $region17
    $region16: #{_npn_forward.1} parent=1 // pred_region
      %s42 = ssub.s32 1024, 1024
      %43 = vsyncadd [#allocation5], %s42
      %s44 = sshll.u32 [#allocation4], 4
      %s45 = int_to_ptr.vmem [resolvable:$true] %s44
      %50 = dma.hbm_to_vmem [thread:$0]  %s3, 1024, %s45, [#allocation5], 64, 64, 4
    $region17: #{_npn_forward.1} parent=1 // pred_fallthru
      _
    // Predicated region
    $region18: #{_npn_forward.1} parent=1 // pred_check
      _
    $region19: #{_npn_forward.1} parent=1 // pred_check_branch
      %52 = sbr.rel (0) target = $region21
    $region20: #{_npn_forward.1} parent=1 // pred_region
      %s54 = ssub.s32 1024, 1024
      %55 = vsyncadd [#allocation5], %s54
      %s56 = sshll.u32 [#allocation6], 4
      %s57 = int_to_ptr.vmem [resolvable:$true] %s56
      %62 = dma.hbm_to_vmem [thread:$0]  %s4, 1024, %s57, [#allocation5], 64, 64, 4
    $region21: #{_npn_forward.1} parent=1 // pred_fallthru
      _
    // Predicated region
    $region22: #{_npn_forward.1} parent=1 // pred_check
      _
    $region23: #{_npn_forward.1} parent=1 // pred_check_branch
      %64 = sbr.rel (0) target = $region25
    $region24: #{_npn_forward.1} parent=1 // pred_region
      %s66 = ssub.s32 16, 16
      %67 = vsyncadd [#allocation8], %s66
      %s69 = sshll.u32 [#allocation7], 4
      %s70 = int_to_ptr.vmem [resolvable:$true] %s69
      %72 = dma.hbm_to_vmem [thread:$0]  %s5, 16, %s70, [#allocation8]
    $region25: #{_npn_forward.1} parent=1 // pred_fallthru
      _
    // Predicated region
    $region26: #{_npn_forward.1} parent=1 // pred_check
      _
    $region27: #{_npn_forward.1} parent=1 // pred_check_branch
      %74 = sbr.rel (0) target = $region29
    $region28: #{_npn_forward.1} parent=1 // pred_region
      %s76 = ssub.s32 16, 16
      %77 = vsyncadd [#allocation8], %s76
      %s79 = sshll.u32 [#allocation9], 4
      %s80 = int_to_ptr.vmem [resolvable:$true] %s79
      %82 = dma.hbm_to_vmem [thread:$0]  %s6, 16, %s80, [#allocation8]
    $region29: #{_npn_forward.1} parent=1 // pred_fallthru
      _
    // Predicated region
    $region30: #{_npn_forward.1} parent=1 // pred_check
      _
    $region31: #{_npn_forward.1} parent=1 // pred_check_branch
      %84 = sbr.rel (0) target = $region33
    $region32: #{_npn_forward.1} parent=1 // pred_region
      _
    $region33: #{_npn_forward.1} parent=1 // pred_fallthru
      _
    // Predicated region
    $region34: #{_npn_forward.1} parent=1 // pred_check
      _
    $region35: #{_npn_forward.1} parent=1 // pred_check_branch
      %86 = sbr.rel (0) target = $region37
    $region36: #{_npn_forward.1} parent=1 // pred_region
      %s88 = ssub.s32 1024, 1024
      %89 = vsyncadd [#allocation11], %s88
      %s90 = sshll.u32 [#allocation10], 4
      %s91 = int_to_ptr.vmem [resolvable:$true] %s90
      %96 = dma.hbm_to_vmem [thread:$0]  %s8, 1024, %s91, [#allocation11], 64, 64, 4
    $region37: #{_npn_forward.1} parent=1 // pred_fallthru
      _
    // Predicated region
    $region38: #{_npn_forward.1} parent=1 // pred_check
      _
    $region39: #{_npn_forward.1} parent=1 // pred_check_branch
      %98 = sbr.rel (0) target = $region41
    $region40: #{_npn_forward.1} parent=1 // pred_region
      %s100 = ssub.s32 1024, 1024
      %101 = vsyncadd [#allocation11], %s100
      %s102 = sshll.u32 [#allocation12], 4
      %s103 = int_to_ptr.vmem [resolvable:$true] %s102
      %108 = dma.hbm_to_vmem [thread:$0]  %s9, 1024, %s103, [#allocation11], 64, 64, 4
    $region41: #{_npn_forward.1} parent=1 // pred_fallthru
      _
    // Predicated region
    $region42: #{_npn_forward.1} parent=1 // pred_check
      _
    $region43: #{_npn_forward.1} parent=1 // pred_check_branch
      %110 = sbr.rel (0) target = $region45
    $region44: #{_npn_forward.1} parent=1 // pred_region
      _
    $region45: #{_npn_forward.1} parent=1 // pred_fallthru
      _
    // Predicated region
    $region46: #{_npn_forward.1} parent=1 // pred_check
      _
    $region47: #{_npn_forward.1} parent=1 // pred_check_branch
      %112 = sbr.rel (0) target = $region49
    $region48: #{_npn_forward.1} parent=1 // pred_region
      _
    $region49: #{_npn_forward.1} parent=1 // pred_fallthru
      _
    // Predicated region
    $region50: #{_npn_forward.1} parent=1 // pred_check
      _
    $region51: #{_npn_forward.1} parent=1 // pred_check_branch
      %114 = sbr.rel (0) target = $region53
    $region52: #{_npn_forward.1} parent=1 // pred_region
      %115 = dma.done [#allocation3], 1024
    $region53: #{_npn_forward.1} parent=1 // pred_fallthru
      _
    // Predicated region
    $region54: #{_npn_forward.1} parent=1 // pred_check
      _
    $region55: #{_npn_forward.1} parent=1 // pred_check_branch
      %117 = sbr.rel (0) target = $region57
    $region56: #{_npn_forward.1} parent=1 // pred_region
      %118 = dma.done [#allocation5], 1024
    $region57: #{_npn_forward.1} parent=1 // pred_fallthru
      _
    // Predicated region
    $region58: #{_npn_forward.1} parent=1 // pred_check
      _
    $region59: #{_npn_forward.1} parent=1 // pred_check_branch
      %120 = sbr.rel (0) target = $region61
    $region60: #{_npn_forward.1} parent=1 // pred_region
      %121 = dma.done [#allocation5], 1024
    $region61: #{_npn_forward.1} parent=1 // pred_fallthru
      _
    // Predicated region
    $region62: #{_npn_forward.1} parent=1 // pred_check
      _
    $region63: #{_npn_forward.1} parent=1 // pred_check_branch
      %123 = sbr.rel (0) target = $region65
    $region64: #{_npn_forward.1} parent=1 // pred_region
      %124 = dma.done [#allocation8], 16
    $region65: #{_npn_forward.1} parent=1 // pred_fallthru
      _
    // Predicated region
    $region66: #{_npn_forward.1} parent=1 // pred_check
      _
    $region67: #{_npn_forward.1} parent=1 // pred_check_branch
      %126 = sbr.rel (0) target = $region69
    $region68: #{_npn_forward.1} parent=1 // pred_region
      %127 = dma.done [#allocation8], 16
    $region69: #{_npn_forward.1} parent=1 // pred_fallthru
      _
    // Predicated region
    $region70: #{_npn_forward.1} parent=1 // pred_check
      _
    $region71: #{_npn_forward.1} parent=1 // pred_check_branch
      %129 = sbr.rel (0) target = $region73
    $region72: #{_npn_forward.1} parent=1 // pred_region
      %130 = dma.done [#allocation11], 1024
    $region73: #{_npn_forward.1} parent=1 // pred_fallthru
      _
    // Predicated region
    $region74: #{_npn_forward.1} parent=1 // pred_check
      _
    $region75: #{_npn_forward.1} parent=1 // pred_check_branch
      %132 = sbr.rel (0) target = $region77
    $region76: #{_npn_forward.1} parent=1 // pred_region
      %133 = dma.done [#allocation11], 1024
    $region77: #{_npn_forward.1} parent=1 // pred_fallthru
      _
    %v135 = vld [vmem:[%s0] sm:$0xff]
    %v136 = vld [vmem:[%s0 + $0x8] sm:$0xff]
    %v137 = vld [vmem:[%s1] sm:$0xff]
    %v138 = vld [vmem:[%s1 + $0x8] sm:$0xff]
    %v139 = vld [vmem:[#allocation2] sm:$0xf]
    %v140 = vld [vmem:[#allocation2 + $0x4] sm:$0xf]
    %v141 = vld [vmem:[#allocation2 + $0x8] sm:$0xf]
    %v142 = vld [vmem:[#allocation2 + $0xc] sm:$0xf]
    %v143 = vld [vmem:[#allocation2 + $0x10] sm:$0xf]
    %v144 = vld [vmem:[#allocation2 + $0x14] sm:$0xf]
    %v145 = vld [vmem:[#allocation2 + $0x18] sm:$0xf]
    %v146 = vld [vmem:[#allocation2 + $0x1c] sm:$0xf]
    %v147 = vld [vmem:[#allocation2 + $0x20] sm:$0xf]
    %v148 = vld [vmem:[#allocation2 + $0x24] sm:$0xf]
    %v149 = vld [vmem:[#allocation2 + $0x28] sm:$0xf]
    %v150 = vld [vmem:[#allocation2 + $0x2c] sm:$0xf]
    %v151 = vld [vmem:[#allocation2 + $0x30] sm:$0xf]
    %v152 = vld [vmem:[#allocation2 + $0x34] sm:$0xf]
    %v153 = vld [vmem:[#allocation2 + $0x38] sm:$0xf]
    %v154 = vld [vmem:[#allocation2 + $0x3c] sm:$0xf]
    %v155 = vld [vmem:[#allocation4] sm:$0xf]
    %v156 = vld [vmem:[#allocation4 + $0x4] sm:$0xf]
    %v157 = vld [vmem:[#allocation4 + $0x8] sm:$0xf]
    %v158 = vld [vmem:[#allocation4 + $0xc] sm:$0xf]
    %v159 = vld [vmem:[#allocation4 + $0x10] sm:$0xf]
    %v160 = vld [vmem:[#allocation4 + $0x14] sm:$0xf]
    %v161 = vld [vmem:[#allocation4 + $0x18] sm:$0xf]
    %v162 = vld [vmem:[#allocation4 + $0x1c] sm:$0xf]
    %v163 = vld [vmem:[#allocation4 + $0x20] sm:$0xf]
    %v164 = vld [vmem:[#allocation4 + $0x24] sm:$0xf]
    %v165 = vld [vmem:[#allocation4 + $0x28] sm:$0xf]
    %v166 = vld [vmem:[#allocation4 + $0x2c] sm:$0xf]
    %v167 = vld [vmem:[#allocation4 + $0x30] sm:$0xf]
    %v168 = vld [vmem:[#allocation4 + $0x34] sm:$0xf]
    %v169 = vld [vmem:[#allocation4 + $0x38] sm:$0xf]
    %v170 = vld [vmem:[#allocation4 + $0x3c] sm:$0xf]
    %v171 = vld [vmem:[#allocation6] sm:$0xf]
    %v172 = vld [vmem:[#allocation6 + $0x4] sm:$0xf]
    %v173 = vld [vmem:[#allocation6 + $0x8] sm:$0xf]
    %v174 = vld [vmem:[#allocation6 + $0xc] sm:$0xf]
    %v175 = vld [vmem:[#allocation6 + $0x10] sm:$0xf]
    %v176 = vld [vmem:[#allocation6 + $0x14] sm:$0xf]
    %v177 = vld [vmem:[#allocation6 + $0x18] sm:$0xf]
    %v178 = vld [vmem:[#allocation6 + $0x1c] sm:$0xf]
    %v179 = vld [vmem:[#allocation6 + $0x20] sm:$0xf]
    %v180 = vld [vmem:[#allocation6 + $0x24] sm:$0xf]
    %v181 = vld [vmem:[#allocation6 + $0x28] sm:$0xf]
    %v182 = vld [vmem:[#allocation6 + $0x2c] sm:$0xf]
    %v183 = vld [vmem:[#allocation6 + $0x30] sm:$0xf]
    %v184 = vld [vmem:[#allocation6 + $0x34] sm:$0xf]
    %v185 = vld [vmem:[#allocation6 + $0x38] sm:$0xf]
    %v186 = vld [vmem:[#allocation6 + $0x3c] sm:$0xf]
    %v187 = vld [vmem:[#allocation7] sm:$0x1]
    %v188 = vld [vmem:[#allocation9] sm:$0x1]
    %v189 = vpack.c.bf16 %v136, %v135
    %v190 = vpack.c.bf16 %v138, %v137
    %v191 = vmul.f32 %v135, %v135
    %v192 = vmul.f32 %v136, %v136
    %v193 = vpack.c.bf16 %v192, %v191
    %v210 = vunpack.c.l.b16 %v139
    %v211 = vunpack.c.l.b16 %v140
    %v212 = vunpack.c.l.b16 %v141
    %v213 = vunpack.c.l.b16 %v142
    %v214 = vunpack.c.l.b16 %v143
    %v215 = vunpack.c.l.b16 %v144
    %v216 = vunpack.c.l.b16 %v145
    %v217 = vunpack.c.l.b16 %v146
    %v218 = vunpack.c.l.b16 %v147
    %v219 = vunpack.c.l.b16 %v148
    %v220 = vunpack.c.l.b16 %v149
    %v221 = vunpack.c.l.b16 %v150
    %v222 = vunpack.c.l.b16 %v151
    %v223 = vunpack.c.l.b16 %v152
    %v224 = vunpack.c.l.b16 %v153
    %v225 = vunpack.c.l.b16 %v154
    %v226 = vpack.c.b16 %v211, %v210
    %v227 = vpack.c.b16 %v213, %v212
    %v228 = vpack.c.b16 %v215, %v214
    %v229 = vpack.c.b16 %v217, %v216
    %v230 = vpack.c.b16 %v219, %v218
    %v231 = vpack.c.b16 %v221, %v220
    %v232 = vpack.c.b16 %v223, %v222
    %v233 = vpack.c.b16 %v225, %v224
    %242 = vmatprep.subr.bf16.mxu0 0
    %243 = vmatpush1.bf16.msra.mxu0 %v226
    %244 = vmatprep.subr.bf16.mxu0 0
    %245 = vmatpush1.bf16.msra.mxu0 %v227
    %246 = vmatprep.subr.bf16.mxu0 0
    %247 = vmatpush1.bf16.msra.mxu0 %v228
    %248 = vmatprep.subr.bf16.mxu0 0
    %249 = vmatpush1.bf16.msra.mxu0 %v229
    %250 = vmatprep.subr.bf16.mxu0 0
    %251 = vmatpush1.bf16.msra.mxu0 %v230
    %252 = vmatprep.subr.bf16.mxu0 0
    %253 = vmatpush1.bf16.msra.mxu0 %v231
    %254 = vmatprep.subr.bf16.mxu0 0
    %255 = vmatpush1.bf16.msra.mxu0 %v232
    %256 = vmatprep.subr.bf16.mxu0 0
    %257 = vmatpush1.bf16.msra.mxu0 %v233
    %258 = vmatprep.subr.bf16.mxu0 0
    %259 = vmatpush1.bf16.msra.mxu0 0
    %260 = vmatprep.subr.bf16.mxu0 0
    %261 = vmatpush1.bf16.msra.mxu0 0
    %262 = vmatprep.subr.bf16.mxu0 0
    %263 = vmatpush1.bf16.msra.mxu0 0
    %264 = vmatprep.subr.bf16.mxu0 0
    %265 = vmatpush1.bf16.msra.mxu0 0
    %266 = vmatprep.subr.bf16.mxu0 0
    %267 = vmatpush1.bf16.msra.mxu0 0
    %268 = vmatprep.subr.bf16.mxu0 0
    %269 = vmatpush1.bf16.msra.mxu0 0
    %270 = vmatprep.subr.bf16.mxu0 0
    %271 = vmatpush1.bf16.msra.mxu0 0
    %272 = vmatprep.subr.bf16.mxu0 0
    %273 = vmatpush1.bf16.msra.mxu0 0
    %274 = vmatprep.mubr.bf16.mxu0 0
    %275 = vmatmul.mubr.bf16.gmra.mrb[0].mxu0 %v189
    %v276 = vpop.f32.mrb[0].mxu0
    %v277 = vadd.f32 0.0, %v276
    %v278 = vpop.f32.mrb[0].mxu0
    %v279 = vpop.f32.mrb[0].mxu0
    %v280 = vadd.f32 0.0, %v279
    %v281 = vpop.f32.mrb[0].mxu0
    %282 = vdwg.mxu0
    %v284 = vlaneseq
    %v285 = vshrl.u32 %v284, 7
    %v286 = vsub.s32 0, %v285
    %v287 = vrot.slane %v187, %v286
    %v289 = vadd.f32 %v287, %v277
    %v290 = vadd.f32 %v287, %v280
    %v307 = vunpack.c.l.b16 %v155
    %v308 = vunpack.c.l.b16 %v156
    %v309 = vunpack.c.l.b16 %v157
    %v310 = vunpack.c.l.b16 %v158
    %v311 = vunpack.c.l.b16 %v159
    %v312 = vunpack.c.l.b16 %v160
    %v313 = vunpack.c.l.b16 %v161
    %v314 = vunpack.c.l.b16 %v162
    %v315 = vunpack.c.l.b16 %v163
    %v316 = vunpack.c.l.b16 %v164
    %v317 = vunpack.c.l.b16 %v165
    %v318 = vunpack.c.l.b16 %v166
    %v319 = vunpack.c.l.b16 %v167
    %v320 = vunpack.c.l.b16 %v168
    %v321 = vunpack.c.l.b16 %v169
    %v322 = vunpack.c.l.b16 %v170
    %v323 = vpack.c.b16 %v308, %v307
    %v324 = vpack.c.b16 %v310, %v309
    %v325 = vpack.c.b16 %v312, %v311
    %v326 = vpack.c.b16 %v314, %v313
    %v327 = vpack.c.b16 %v316, %v315
    %v328 = vpack.c.b16 %v318, %v317
    %v329 = vpack.c.b16 %v320, %v319
    %v330 = vpack.c.b16 %v322, %v321
    %339 = vmatprep.subr.bf16.mxu0 0
    %340 = vmatpush1.bf16.msra.mxu0 %v323
    %341 = vmatprep.subr.bf16.mxu0 0
    %342 = vmatpush1.bf16.msra.mxu0 %v324
    %343 = vmatprep.subr.bf16.mxu0 0
    %344 = vmatpush1.bf16.msra.mxu0 %v325
    %345 = vmatprep.subr.bf16.mxu0 0
    %346 = vmatpush1.bf16.msra.mxu0 %v326
    %347 = vmatprep.subr.bf16.mxu0 0
    %348 = vmatpush1.bf16.msra.mxu0 %v327
    %349 = vmatprep.subr.bf16.mxu0 0
    %350 = vmatpush1.bf16.msra.mxu0 %v328
    %351 = vmatprep.subr.bf16.mxu0 0
    %352 = vmatpush1.bf16.msra.mxu0 %v329
    %353 = vmatprep.subr.bf16.mxu0 0
    %354 = vmatpush1.bf16.msra.mxu0 %v330
    %355 = vmatprep.subr.bf16.mxu0 0
    %356 = vmatpush1.bf16.msra.mxu0 0
    %357 = vmatprep.subr.bf16.mxu0 0
    %358 = vmatpush1.bf16.msra.mxu0 0
    %359 = vmatprep.subr.bf16.mxu0 0
    %360 = vmatpush1.bf16.msra.mxu0 0
    %361 = vmatprep.subr.bf16.mxu0 0
    %362 = vmatpush1.bf16.msra.mxu0 0
    %363 = vmatprep.subr.bf16.mxu0 0
    %364 = vmatpush1.bf16.msra.mxu0 0
    %365 = vmatprep.subr.bf16.mxu0 0
    %366 = vmatpush1.bf16.msra.mxu0 0
    %367 = vmatprep.subr.bf16.mxu0 0
    %368 = vmatpush1.bf16.msra.mxu0 0
    %369 = vmatprep.subr.bf16.mxu0 0
    %370 = vmatpush1.bf16.msra.mxu0 0
    %371 = vmatprep.mubr.bf16.mxu0 0
    %372 = vmatmul.mubr.bf16.gmra.mrb[0].mxu0 %v190
    %v373 = vpop.f32.mrb[0].mxu0
    %v374 = vadd.f32 0.0, %v373
    %v375 = vpop.f32.mrb[0].mxu0
    %v376 = vpop.f32.mrb[0].mxu0
    %v377 = vadd.f32 0.0, %v376
    %v378 = vpop.f32.mrb[0].mxu0
    %379 = vdwg.mxu0
    %v381 = vlaneseq
    %v382 = vshrl.u32 %v381, 7
    %v383 = vsub.s32 0, %v382
    %v384 = vrot.slane %v188, %v383
    %v386 = vadd.f32 %v384, %v374
    %v387 = vadd.f32 %v384, %v377
    %v404 = vunpack.c.l.b16 %v171
    %v405 = vunpack.c.l.b16 %v172
    %v406 = vunpack.c.l.b16 %v173
    %v407 = vunpack.c.l.b16 %v174
    %v408 = vunpack.c.l.b16 %v175
    %v409 = vunpack.c.l.b16 %v176
    %v410 = vunpack.c.l.b16 %v177
    %v411 = vunpack.c.l.b16 %v178
    %v412 = vunpack.c.l.b16 %v179
    %v413 = vunpack.c.l.b16 %v180
    %v414 = vunpack.c.l.b16 %v181
    %v415 = vunpack.c.l.b16 %v182
    %v416 = vunpack.c.l.b16 %v183
    %v417 = vunpack.c.l.b16 %v184
    %v418 = vunpack.c.l.b16 %v185
    %v419 = vunpack.c.l.b16 %v186
    %v420 = vpack.c.b16 %v405, %v404
    %v421 = vpack.c.b16 %v407, %v406
    %v422 = vpack.c.b16 %v409, %v408
    %v423 = vpack.c.b16 %v411, %v410
    %v424 = vpack.c.b16 %v413, %v412
    %v425 = vpack.c.b16 %v415, %v414
    %v426 = vpack.c.b16 %v417, %v416
    %v427 = vpack.c.b16 %v419, %v418
    %436 = vmatprep.subr.bf16.mxu0 0
    %437 = vmatpush1.bf16.msra.mxu0 %v420
    %438 = vmatprep.subr.bf16.mxu0 0
    %439 = vmatpush1.bf16.msra.mxu0 %v421
    %440 = vmatprep.subr.bf16.mxu0 0
    %441 = vmatpush1.bf16.msra.mxu0 %v422
    %442 = vmatprep.subr.bf16.mxu0 0
    %443 = vmatpush1.bf16.msra.mxu0 %v423
    %444 = vmatprep.subr.bf16.mxu0 0
    %445 = vmatpush1.bf16.msra.mxu0 %v424
    %446 = vmatprep.subr.bf16.mxu0 0
    %447 = vmatpush1.bf16.msra.mxu0 %v425
    %448 = vmatprep.subr.bf16.mxu0 0
    %449 = vmatpush1.bf16.msra.mxu0 %v426
    %450 = vmatprep.subr.bf16.mxu0 0
    %451 = vmatpush1.bf16.msra.mxu0 %v427
    %452 = vmatprep.subr.bf16.mxu0 0
    %453 = vmatpush1.bf16.msra.mxu0 0
    %454 = vmatprep.subr.bf16.mxu0 0
    %455 = vmatpush1.bf16.msra.mxu0 0
    %456 = vmatprep.subr.bf16.mxu0 0
    %457 = vmatpush1.bf16.msra.mxu0 0
    %458 = vmatprep.subr.bf16.mxu0 0
    %459 = vmatpush1.bf16.msra.mxu0 0
    %460 = vmatprep.subr.bf16.mxu0 0
    %461 = vmatpush1.bf16.msra.mxu0 0
    %462 = vmatprep.subr.bf16.mxu0 0
    %463 = vmatpush1.bf16.msra.mxu0 0
    %464 = vmatprep.subr.bf16.mxu0 0
    %465 = vmatpush1.bf16.msra.mxu0 0
    %466 = vmatprep.subr.bf16.mxu0 0
    %467 = vmatpush1.bf16.msra.mxu0 0
    %468 = vmatprep.mubr.bf16.mxu0 0
    %469 = vmatmul.mubr.bf16.gmra.mrb[0].mxu0 %v193
    %v470 = vpop.f32.mrb[0].mxu0
    %v471 = vadd.f32 0.0, %v470
    %v472 = vpop.f32.mrb[0].mxu0
    %v473 = vpop.f32.mrb[0].mxu0
    %v474 = vadd.f32 0.0, %v473
    %v475 = vpop.f32.mrb[0].mxu0
    %476 = vdwg.mxu0
    %v477 = vadd.f32 %v386, %v471
    %v478 = vadd.f32 %v387, %v474
    %v479 = vmul.f32 %v477, 0.3926991
    %v480 = vmul.f32 %v478, 0.3926991
    %v481 = vadd.f32 %v479, 1.0
    %v482 = vadd.f32 %v480, 1.0
    %v483 = vrsqrt.pop %v481
    %v484 = vrsqrt.pop %v482
    %v485 = vmul.f32 %v289, %v483
    %v486 = vmul.f32 %v290, %v484
    %v487 = vxor.u32 %v485, 2147483648
    %v488 = vxor.u32 %v486, 2147483648
    %v489 = vmul.f32 %v487, 1.442695
    %v490 = vpow.pop %v489
    %v491 = vmul.f32 %v488, 1.442695
    %v492 = vpow.pop %v491
    %v493 = vadd.f32 %v490, 1.0
    %v494 = vadd.f32 %v492, 1.0
    %v495 = vrcp.pop %v493
    %v496 = vmul.f32 1.0, %v495
    %v497 = vrcp.pop %v494
    %v498 = vmul.f32 1.0, %v497
    %v499 = vadd.f32 %v289, -0.8813736
    %v500 = vadd.f32 %v290, -0.8813736
    %v501 = vmul.f32 %v499, 1.1715729
    %v502 = vmul.f32 %v500, 1.1715729
    %v503 = vmul.f32 %v477, 1.372583
    %v504 = vmul.f32 %v478, 1.372583
    %v505 = vmul.f32 %v503, 0.3926991
    %v506 = vmul.f32 %v504, 0.3926991
    %v507 = vadd.f32 %v505, 1.0
    %v508 = vadd.f32 %v506, 1.0
    %v509 = vrsqrt.pop %v507
    %v510 = vrsqrt.pop %v508
    %v511 = vmul.f32 %v501, %v509
    %v512 = vmul.f32 %v502, %v510
    %v513 = vxor.u32 %v511, 2147483648
    %v514 = vxor.u32 %v512, 2147483648
    %v515 = vmul.f32 %v513, 1.442695
    %v516 = vpow.pop %v515
    %v517 = vmul.f32 %v514, 1.442695
    %v518 = vpow.pop %v517
    %v519 = vadd.f32 %v516, 1.0
    %v520 = vadd.f32 %v518, 1.0
    %v521 = vrcp.pop %v519
    %v522 = vmul.f32 1.0, %v521
    %v523 = vrcp.pop %v520
    %v524 = vmul.f32 1.0, %v523
    %v525 = vmul.f32 %v496, %v496
    %v526 = vmul.f32 %v498, %v498
    %v527 = vsub.f32 %v522, %v525
    %v528 = vsub.f32 %v524, %v526
    %v529 = vld [vmem:[%s7] sm:$0xf]
    %v530 = vld [vmem:[%s7 + $0x4] sm:$0xf]
    %v531 = vld [vmem:[%s7 + $0x8] sm:$0xf]
    %v532 = vld [vmem:[%s7 + $0xc] sm:$0xf]
    %v533 = vld [vmem:[%s7 + $0x10] sm:$0xf]
    %v534 = vld [vmem:[%s7 + $0x14] sm:$0xf]
    %v535 = vld [vmem:[%s7 + $0x18] sm:$0xf]
    %v536 = vld [vmem:[%s7 + $0x1c] sm:$0xf]
    %v537 = vld [vmem:[%s7 + $0x20] sm:$0xf]
    %v538 = vld [vmem:[%s7 + $0x24] sm:$0xf]
    %v539 = vld [vmem:[%s7 + $0x28] sm:$0xf]
    %v540 = vld [vmem:[%s7 + $0x2c] sm:$0xf]
    %v541 = vld [vmem:[%s7 + $0x30] sm:$0xf]
    %v542 = vld [vmem:[%s7 + $0x34] sm:$0xf]
    %v543 = vld [vmem:[%s7 + $0x38] sm:$0xf]
    %v544 = vld [vmem:[%s7 + $0x3c] sm:$0xf]
    %v545 = vld [vmem:[#allocation10] sm:$0xf]
    %v546 = vld [vmem:[#allocation10 + $0x4] sm:$0xf]
    %v547 = vld [vmem:[#allocation10 + $0x8] sm:$0xf]
    %v548 = vld [vmem:[#allocation10 + $0xc] sm:$0xf]
    %v549 = vld [vmem:[#allocation10 + $0x10] sm:$0xf]
    %v550 = vld [vmem:[#allocation10 + $0x14] sm:$0xf]
    %v551 = vld [vmem:[#allocation10 + $0x18] sm:$0xf]
    %v552 = vld [vmem:[#allocation10 + $0x1c] sm:$0xf]
    %v553 = vld [vmem:[#allocation10 + $0x20] sm:$0xf]
    %v554 = vld [vmem:[#allocation10 + $0x24] sm:$0xf]
    %v555 = vld [vmem:[#allocation10 + $0x28] sm:$0xf]
    %v556 = vld [vmem:[#allocation10 + $0x2c] sm:$0xf]
    %v557 = vld [vmem:[#allocation10 + $0x30] sm:$0xf]
    %v558 = vld [vmem:[#allocation10 + $0x34] sm:$0xf]
    %v559 = vld [vmem:[#allocation10 + $0x38] sm:$0xf]
    %v560 = vld [vmem:[#allocation10 + $0x3c] sm:$0xf]
    %v561 = vld [vmem:[#allocation12] sm:$0xf]
    %v562 = vld [vmem:[#allocation12 + $0x4] sm:$0xf]
    %v563 = vld [vmem:[#allocation12 + $0x8] sm:$0xf]
    %v564 = vld [vmem:[#allocation12 + $0xc] sm:$0xf]
    %v565 = vld [vmem:[#allocation12 + $0x10] sm:$0xf]
    %v566 = vld [vmem:[#allocation12 + $0x14] sm:$0xf]
    %v567 = vld [vmem:[#allocation12 + $0x18] sm:$0xf]
    %v568 = vld [vmem:[#allocation12 + $0x1c] sm:$0xf]
    %v569 = vld [vmem:[#allocation12 + $0x20] sm:$0xf]
    %v570 = vld [vmem:[#allocation12 + $0x24] sm:$0xf]
    %v571 = vld [vmem:[#allocation12 + $0x28] sm:$0xf]
    %v572 = vld [vmem:[#allocation12 + $0x2c] sm:$0xf]
    %v573 = vld [vmem:[#allocation12 + $0x30] sm:$0xf]
    %v574 = vld [vmem:[#allocation12 + $0x34] sm:$0xf]
    %v575 = vld [vmem:[#allocation12 + $0x38] sm:$0xf]
    %v576 = vld [vmem:[#allocation12 + $0x3c] sm:$0xf]
    %v577 = vld [vmem:[%s10] sm:$0x1]
    %v578 = vld [vmem:[%s11] sm:$0x1]
    %v579 = vpack.c.bf16 %v498, %v496
    %v580 = vpack.c.bf16 %v528, %v527
    %v581 = vpack.c.bf16 %v526, %v525
    %v598 = vunpack.c.l.b16 %v529
    %v599 = vunpack.c.l.b16 %v530
    %v600 = vunpack.c.l.b16 %v531
    %v601 = vunpack.c.l.b16 %v532
    %v602 = vunpack.c.l.b16 %v533
    %v603 = vunpack.c.l.b16 %v534
    %v604 = vunpack.c.l.b16 %v535
    %v605 = vunpack.c.l.b16 %v536
    %v606 = vunpack.c.l.b16 %v537
    %v607 = vunpack.c.l.b16 %v538
    %v608 = vunpack.c.l.b16 %v539
    %v609 = vunpack.c.l.b16 %v540
    %v610 = vunpack.c.l.b16 %v541
    %v611 = vunpack.c.l.b16 %v542
    %v612 = vunpack.c.l.b16 %v543
    %v613 = vunpack.c.l.b16 %v544
    %v614 = vpack.c.b16 %v599, %v598
    %v615 = vpack.c.b16 %v601, %v600
    %v616 = vpack.c.b16 %v603, %v602
    %v617 = vpack.c.b16 %v605, %v604
    %v618 = vpack.c.b16 %v607, %v606
    %v619 = vpack.c.b16 %v609, %v608
    %v620 = vpack.c.b16 %v611, %v610
    %v621 = vpack.c.b16 %v613, %v612
    %630 = vmatprep.subr.bf16.mxu0 0
    %631 = vmatpush1.bf16.msra.mxu0 %v614
    %632 = vmatprep.subr.bf16.mxu0 0
    %633 = vmatpush1.bf16.msra.mxu0 %v615
    %634 = vmatprep.subr.bf16.mxu0 0
    %635 = vmatpush1.bf16.msra.mxu0 %v616
    %636 = vmatprep.subr.bf16.mxu0 0
    %637 = vmatpush1.bf16.msra.mxu0 %v617
    %638 = vmatprep.subr.bf16.mxu0 0
    %639 = vmatpush1.bf16.msra.mxu0 %v618
    %640 = vmatprep.subr.bf16.mxu0 0
    %641 = vmatpush1.bf16.msra.mxu0 %v619
    %642 = vmatprep.subr.bf16.mxu0 0
    %643 = vmatpush1.bf16.msra.mxu0 %v620
    %644 = vmatprep.subr.bf16.mxu0 0
    %645 = vmatpush1.bf16.msra.mxu0 %v621
    %646 = vmatprep.subr.bf16.mxu0 0
    %647 = vmatpush1.bf16.msra.mxu0 0
    %648 = vmatprep.subr.bf16.mxu0 0
    %649 = vmatpush1.bf16.msra.mxu0 0
    %650 = vmatprep.subr.bf16.mxu0 0
    %651 = vmatpush1.bf16.msra.mxu0 0
    %652 = vmatprep.subr.bf16.mxu0 0
    %653 = vmatpush1.bf16.msra.mxu0 0
    %654 = vmatprep.subr.bf16.mxu0 0
    %655 = vmatpush1.bf16.msra.mxu0 0
    %656 = vmatprep.subr.bf16.mxu0 0
    %657 = vmatpush1.bf16.msra.mxu0 0
    %658 = vmatprep.subr.bf16.mxu0 0
    %659 = vmatpush1.bf16.msra.mxu0 0
    %660 = vmatprep.subr.bf16.mxu0 0
    %661 = vmatpush1.bf16.msra.mxu0 0
    %662 = vmatprep.mubr.bf16.mxu0 0
    %663 = vmatmul.mubr.bf16.gmra.mrb[0].mxu0 %v579
    %v664 = vpop.f32.mrb[0].mxu0
    %v665 = vadd.f32 0.0, %v664
    %v666 = vpop.f32.mrb[0].mxu0
    %v667 = vpop.f32.mrb[0].mxu0
    %v668 = vadd.f32 0.0, %v667
    %v669 = vpop.f32.mrb[0].mxu0
    %670 = vdwg.mxu0
    %v672 = vlaneseq
    %v673 = vshrl.u32 %v672, 7
    %v674 = vsub.s32 0, %v673
    %v675 = vrot.slane %v577, %v674
    %v677 = vadd.f32 %v675, %v665
    %v678 = vadd.f32 %v675, %v668
    %v695 = vunpack.c.l.b16 %v545
    %v696 = vunpack.c.l.b16 %v546
    %v697 = vunpack.c.l.b16 %v547
    %v698 = vunpack.c.l.b16 %v548
    %v699 = vunpack.c.l.b16 %v549
    %v700 = vunpack.c.l.b16 %v550
    %v701 = vunpack.c.l.b16 %v551
    %v702 = vunpack.c.l.b16 %v552
    %v703 = vunpack.c.l.b16 %v553
    %v704 = vunpack.c.l.b16 %v554
    %v705 = vunpack.c.l.b16 %v555
    %v706 = vunpack.c.l.b16 %v556
    %v707 = vunpack.c.l.b16 %v557
    %v708 = vunpack.c.l.b16 %v558
    %v709 = vunpack.c.l.b16 %v559
    %v710 = vunpack.c.l.b16 %v560
    %v711 = vpack.c.b16 %v696, %v695
    %v712 = vpack.c.b16 %v698, %v697
    %v713 = vpack.c.b16 %v700, %v699
    %v714 = vpack.c.b16 %v702, %v701
    %v715 = vpack.c.b16 %v704, %v703
    %v716 = vpack.c.b16 %v706, %v705
    %v717 = vpack.c.b16 %v708, %v707
    %v718 = vpack.c.b16 %v710, %v709
    %727 = vmatprep.subr.bf16.mxu0 0
    %728 = vmatpush1.bf16.msra.mxu0 %v711
    %729 = vmatprep.subr.bf16.mxu0 0
    %730 = vmatpush1.bf16.msra.mxu0 %v712
    %731 = vmatprep.subr.bf16.mxu0 0
    %732 = vmatpush1.bf16.msra.mxu0 %v713
    %733 = vmatprep.subr.bf16.mxu0 0
    %734 = vmatpush1.bf16.msra.mxu0 %v714
    %735 = vmatprep.subr.bf16.mxu0 0
    %736 = vmatpush1.bf16.msra.mxu0 %v715
    %737 = vmatprep.subr.bf16.mxu0 0
    %738 = vmatpush1.bf16.msra.mxu0 %v716
    %739 = vmatprep.subr.bf16.mxu0 0
    %740 = vmatpush1.bf16.msra.mxu0 %v717
    %741 = vmatprep.subr.bf16.mxu0 0
    %742 = vmatpush1.bf16.msra.mxu0 %v718
    %743 = vmatprep.subr.bf16.mxu0 0
    %744 = vmatpush1.bf16.msra.mxu0 0
    %745 = vmatprep.subr.bf16.mxu0 0
    %746 = vmatpush1.bf16.msra.mxu0 0
    %747 = vmatprep.subr.bf16.mxu0 0
    %748 = vmatpush1.bf16.msra.mxu0 0
    %749 = vmatprep.subr.bf16.mxu0 0
    %750 = vmatpush1.bf16.msra.mxu0 0
    %751 = vmatprep.subr.bf16.mxu0 0
    %752 = vmatpush1.bf16.msra.mxu0 0
    %753 = vmatprep.subr.bf16.mxu0 0
    %754 = vmatpush1.bf16.msra.mxu0 0
    %755 = vmatprep.subr.bf16.mxu0 0
    %756 = vmatpush1.bf16.msra.mxu0 0
    %757 = vmatprep.subr.bf16.mxu0 0
    %758 = vmatpush1.bf16.msra.mxu0 0
    %759 = vmatprep.mubr.bf16.mxu0 0
    %760 = vmatmul.mubr.bf16.gmra.mrb[0].mxu0 %v580
    %v761 = vpop.f32.mrb[0].mxu0
    %v762 = vadd.f32 0.0, %v761
    %v763 = vpop.f32.mrb[0].mxu0
    %v764 = vpop.f32.mrb[0].mxu0
    %v765 = vadd.f32 0.0, %v764
    %v766 = vpop.f32.mrb[0].mxu0
    %767 = vdwg.mxu0
    %v769 = vlaneseq
    %v770 = vshrl.u32 %v769, 7
    %v771 = vsub.s32 0, %v770
    %v772 = vrot.slane %v578, %v771
    %v774 = vadd.f32 %v772, %v762
    %v775 = vadd.f32 %v772, %v765
    %v792 = vunpack.c.l.b16 %v561
    %v793 = vunpack.c.l.b16 %v562
    %v794 = vunpack.c.l.b16 %v563
    %v795 = vunpack.c.l.b16 %v564
    %v796 = vunpack.c.l.b16 %v565
    %v797 = vunpack.c.l.b16 %v566
    %v798 = vunpack.c.l.b16 %v567
    %v799 = vunpack.c.l.b16 %v568
    %v800 = vunpack.c.l.b16 %v569
    %v801 = vunpack.c.l.b16 %v570
    %v802 = vunpack.c.l.b16 %v571
    %v803 = vunpack.c.l.b16 %v572
    %v804 = vunpack.c.l.b16 %v573
    %v805 = vunpack.c.l.b16 %v574
    %v806 = vunpack.c.l.b16 %v575
    %v807 = vunpack.c.l.b16 %v576
    %v808 = vpack.c.b16 %v793, %v792
    %v809 = vpack.c.b16 %v795, %v794
    %v810 = vpack.c.b16 %v797, %v796
    %v811 = vpack.c.b16 %v799, %v798
    %v812 = vpack.c.b16 %v801, %v800
    %v813 = vpack.c.b16 %v803, %v802
    %v814 = vpack.c.b16 %v805, %v804
    %v815 = vpack.c.b16 %v807, %v806
    %824 = vmatprep.subr.bf16.mxu0 0
    %825 = vmatpush1.bf16.msra.mxu0 %v808
    %826 = vmatprep.subr.bf16.mxu0 0
    %827 = vmatpush1.bf16.msra.mxu0 %v809
    %828 = vmatprep.subr.bf16.mxu0 0
    %829 = vmatpush1.bf16.msra.mxu0 %v810
    %830 = vmatprep.subr.bf16.mxu0 0
    %831 = vmatpush1.bf16.msra.mxu0 %v811
    %832 = vmatprep.subr.bf16.mxu0 0
    %833 = vmatpush1.bf16.msra.mxu0 %v812
    %834 = vmatprep.subr.bf16.mxu0 0
    %835 = vmatpush1.bf16.msra.mxu0 %v813
    %836 = vmatprep.subr.bf16.mxu0 0
    %837 = vmatpush1.bf16.msra.mxu0 %v814
    %838 = vmatprep.subr.bf16.mxu0 0
    %839 = vmatpush1.bf16.msra.mxu0 %v815
    %840 = vmatprep.subr.bf16.mxu0 0
    %841 = vmatpush1.bf16.msra.mxu0 0
    %842 = vmatprep.subr.bf16.mxu0 0
    %843 = vmatpush1.bf16.msra.mxu0 0
    %844 = vmatprep.subr.bf16.mxu0 0
    %845 = vmatpush1.bf16.msra.mxu0 0
    %846 = vmatprep.subr.bf16.mxu0 0
    %847 = vmatpush1.bf16.msra.mxu0 0
    %848 = vmatprep.subr.bf16.mxu0 0
    %849 = vmatpush1.bf16.msra.mxu0 0
    %850 = vmatprep.subr.bf16.mxu0 0
    %851 = vmatpush1.bf16.msra.mxu0 0
    %852 = vmatprep.subr.bf16.mxu0 0
    %853 = vmatpush1.bf16.msra.mxu0 0
    %854 = vmatprep.subr.bf16.mxu0 0
    %855 = vmatpush1.bf16.msra.mxu0 0
    %856 = vmatprep.mubr.bf16.mxu0 0
    %857 = vmatmul.mubr.bf16.gmra.mrb[0].mxu0 %v581
    %v858 = vpop.f32.mrb[0].mxu0
    %v859 = vadd.f32 0.0, %v858
    %v860 = vpop.f32.mrb[0].mxu0
    %v861 = vpop.f32.mrb[0].mxu0
    %v862 = vadd.f32 0.0, %v861
    %v863 = vpop.f32.mrb[0].mxu0
    %864 = vdwg.mxu0
    %v865 = vadd.f32 %v774, %v859
    %v866 = vadd.f32 %v775, %v862
    %v867 = vmul.f32 %v865, 0.3926991
    %v868 = vmul.f32 %v866, 0.3926991
    %v869 = vadd.f32 %v867, 1.0
    %v870 = vadd.f32 %v868, 1.0
    %v871 = vrsqrt.pop %v869
    %v872 = vrsqrt.pop %v870
    %v873 = vmul.f32 %v677, %v871
    %v874 = vmul.f32 %v678, %v872
    %v875 = vxor.u32 %v873, 2147483648
    %v876 = vxor.u32 %v874, 2147483648
    %v877 = vmul.f32 %v875, 1.442695
    %v878 = vpow.pop %v877
    %v879 = vmul.f32 %v876, 1.442695
    %v880 = vpow.pop %v879
    %v881 = vadd.f32 %v878, 1.0
    %v882 = vadd.f32 %v880, 1.0
    %v883 = vrcp.pop %v881
    %v884 = vmul.f32 1.0, %v883
    %v885 = vrcp.pop %v882
    %v886 = vmul.f32 1.0, %v885
    %v887 = vadd.f32 %v677, -0.8813736
    %v888 = vadd.f32 %v678, -0.8813736
    %v889 = vmul.f32 %v887, 1.1715729
    %v890 = vmul.f32 %v888, 1.1715729
    %v891 = vmul.f32 %v865, 1.372583
    %v892 = vmul.f32 %v866, 1.372583
    %v893 = vmul.f32 %v891, 0.3926991
    %v894 = vmul.f32 %v892, 0.3926991
    %v895 = vadd.f32 %v893, 1.0
    %v896 = vadd.f32 %v894, 1.0
    %v897 = vrsqrt.pop %v895
    %v898 = vrsqrt.pop %v896
    %v899 = vmul.f32 %v889, %v897
    %v900 = vmul.f32 %v890, %v898
    %v901 = vxor.u32 %v899, 2147483648
    %v902 = vxor.u32 %v900, 2147483648
    %v903 = vmul.f32 %v901, 1.442695
    %v904 = vpow.pop %v903
    %v905 = vmul.f32 %v902, 1.442695
    %v906 = vpow.pop %v905
    %v907 = vadd.f32 %v904, 1.0
    %v908 = vadd.f32 %v906, 1.0
    %v909 = vrcp.pop %v907
    %v910 = vmul.f32 1.0, %v909
    %v911 = vrcp.pop %v908
    %v912 = vmul.f32 1.0, %v911
    %v913 = vmul.f32 %v884, %v884
    %v914 = vmul.f32 %v886, %v886
    %v915 = vsub.f32 %v910, %v913
    %v916 = vsub.f32 %v912, %v914
    %917 = vst [vmem:[%s12] sm:$0xff] %v884
    %918 = vst [vmem:[%s12 + $0x8] sm:$0xff] %v886
    %919 = vst [vmem:[%s13] sm:$0xff] %v915
    %920 = vst [vmem:[%s13 + $0x8] sm:$0xff] %v916
    // Predicated region
    $region78: #{_npn_forward.1} parent=1 // pred_check
      _
    $region79: #{_npn_forward.1} parent=1 // pred_check_branch
      %922 = sbr.rel (0) target = $region81
    $region80: #{_npn_forward.1} parent=1 // pred_region
      _
    $region81: #{_npn_forward.1} parent=1 // pred_fallthru
      _
    // Predicated region
    $region82: #{_npn_forward.1} parent=1 // pred_check
      _
    $region83: #{_npn_forward.1} parent=1 // pred_check_branch
      %924 = sbr.rel (0) target = $region85
    $region84: #{_npn_forward.1} parent=1 // pred_region
      _
    $region85: #{_npn_forward.1} parent=1 // pred_fallthru
      _
    // Predicated region
    $region86: #{_npn_forward.1} parent=1 // pred_check
      _
    $region87: #{_npn_forward.1} parent=1 // pred_check_branch
      %926 = sbr.rel (0) target = $region89
    $region88: #{_npn_forward.1} parent=1 // pred_region
      _
    $region89: #{_npn_forward.1} parent=1 // pred_fallthru
      _
    // Predicated region
    $region90: #{_npn_forward.1} parent=1 // pred_check
      _
    $region91: #{_npn_forward.1} parent=1 // pred_check_branch
      %928 = sbr.rel (0) target = $region93
    $region92: #{_npn_forward.1} parent=1 // pred_region
      _
    $region93: #{_npn_forward.1} parent=1 // pred_fallthru
      _
    %929 = vsyncpa [#allocation3], 1
    %930 = vsyncpa [#allocation5], 1
    %931 = vsyncpa [#allocation8], 1
    %932 = vsyncpa [#allocation11], 1

</llo_original>
